<compile_context>
chip_gen: v5e
topology: v5e:2x2
jax: 0.10.0
libtpu: 0.0.40
codegen_flags: <defaults>
</compile_context>

<pallas_src>
import jax
import jax.numpy as jnp
from jax.experimental import pallas as pl
from jax.experimental.pallas import tpu as pltpu


def _leaky_relu(x, slope=0.01):
    return jnp.where(x >= 0, x, slope * x)


def _round_up(n, m):
    return ((n + m - 1) // m) * m


def mlp3_kernel(x_ref,
                w1_ref, b1_ref,
                w2_ref, b2_ref,
                w3_ref, b3_ref,
                w4_ref, b4_ref,
                o_ref):
    # x arrives already cast to bf16 by the wrapper (halves the input DMA).
    x = x_ref[...]

    # fc1 + leaky_relu   (bn1/d1 folded into fc2 weights / identity in eval)
    h = jnp.dot(x, w1_ref[...], preferred_element_type=jnp.float32) + b1_ref[...]
    h = _leaky_relu(h)

    # fc2' (= bn1-folded fc2) + leaky_relu
    h = jnp.dot(h.astype(jnp.bfloat16), w2_ref[...],
                preferred_element_type=jnp.float32) + b2_ref[...]
    h = _leaky_relu(h)

    # fc3' (= bn2-folded fc3) + leaky_relu
    h = jnp.dot(h.astype(jnp.bfloat16), w3_ref[...],
                preferred_element_type=jnp.float32) + b3_ref[...]
    h = _leaky_relu(h)

    # fc4' (= bn3-folded fc4), lane-padded to 128 output columns
    h = jnp.dot(h.astype(jnp.bfloat16), w4_ref[...],
                preferred_element_type=jnp.float32) + b4_ref[...]
    o_ref[...] = h.astype(o_ref.dtype)


def _fold_and_pack(params, d_out_pad):
    """Fold eval-mode BN affine (s,t) into the following layer; cast weights
    to bf16; pad the output head to a lane-dense width."""
    w1 = params["w1"]
    b1 = params["b1"]
    # (h*s + t) @ W + b  ==  h @ (s^T * W) + (t @ W + b)
    w2 = params["s1"].reshape(-1, 1) * params["w2"]
    b2 = params["t1"] @ params["w2"] + params["b2"]
    w3 = params["s2"].reshape(-1, 1) * params["w3"]
    b3 = params["t2"] @ params["w3"] + params["b3"]
    w4 = params["s3"].reshape(-1, 1) * params["w4"]
    b4 = params["t3"] @ params["w4"] + params["b4"]

    # Pad the output head so the final store is lane-dense (>=128 lanes).
    d_out = w4.shape[1]
    pad = d_out_pad - d_out
    if pad > 0:
        w4 = jnp.pad(w4, ((0, 0), (0, pad)))
        b4 = jnp.pad(b4, ((0, 0), (0, pad)))

    bf16 = jnp.bfloat16
    return [
        w1.astype(bf16), b1.astype(jnp.float32),
        w2.astype(bf16), b2.astype(jnp.float32),
        w3.astype(bf16), b3.astype(jnp.float32),
        w4.astype(bf16), b4.astype(jnp.float32),
    ]


def mlp3_forward(x, params, *, block_batch=None):
    """x: [B, inputs_size] float32."""
    B, D_in = x.shape
    D_out = params["w4"].shape[1]
    D_out_pad = _round_up(max(D_out, 128), 128)

    # Batch tile: whole (padded) batch for small inputs, 256-row MXU-filling
    # tiles for large ones.
    if block_batch is None:
        block_batch = min(256, _round_up(B, 8))
    B_pad = _round_up(B, block_batch)

    x_in = x.astype(jnp.bfloat16)
    if B_pad != B:
        x_in = jnp.pad(x_in, ((0, B_pad - B), (0, 0)))

    param_arrays = _fold_and_pack(params, D_out_pad)

    def full_spec(arr):
        return pl.BlockSpec(arr.shape, lambda i: (0, 0))

    grid = (B_pad // block_batch,)
    in_specs = [pl.BlockSpec((block_batch, D_in), lambda i: (i, 0))]
    in_specs += [full_spec(a) for a in param_arrays]
    out_spec = pl.BlockSpec((block_batch, D_out_pad), lambda i: (i, 0))

    h1 = params["w1"].shape[1]
    h2 = params["w2"].shape[1]
    h3 = params["w3"].shape[1]
    flops = 2 * B_pad * (D_in * h1 + h1 * h2 + h2 * h3 + h3 * D_out_pad)
    bytes_accessed = (x_in.size * 2
                      + sum(int(a.size) * a.dtype.itemsize for a in param_arrays)
                      + B_pad * D_out_pad * 4)

    out = pl.pallas_call(
        mlp3_kernel,
        out_shape=jax.ShapeDtypeStruct((B_pad, D_out_pad), jnp.float32),
        grid_spec=pltpu.PrefetchScalarGridSpec(
            num_scalar_prefetch=0,
            grid=grid,
            in_specs=in_specs,
            out_specs=out_spec,
        ),
        compiler_params=pltpu.CompilerParams(
            dimension_semantics=("parallel",),
            vmem_limit_bytes=64 * 1024 * 1024,
        ),
        cost_estimate=pl.CostEstimate(
            flops=flops, transcendentals=0, bytes_accessed=bytes_accessed),
    )(x_in, *param_arrays)

    return out[:B, :D_out]


def init_params(key, inputs_size, output_size,
                h1=2 ** 7, h2=2 ** 5, h3=2 ** 3):
    """Deterministic synthetic parameters (PyTorch default Linear init)."""
    dims = [(inputs_size, h1), (h1, h2), (h2, h3), (h3, output_size)]
    params = {}
    keys = jax.random.split(key, 16)
    ki = 0
    for li, (fan_in, fan_out) in enumerate(dims, start=1):
        bound = 1.0 / jnp.sqrt(jnp.float32(fan_in))
        # stored as [in, out]  == torch weight [out, in] transposed
        params[f"w{li}"] = jax.random.uniform(
            keys[ki], (fan_in, fan_out), jnp.float32, -bound, bound); ki += 1
        params[f"b{li}"] = jax.random.uniform(
            keys[ki], (1, fan_out), jnp.float32, -bound, bound); ki += 1

    # BatchNorm1d (eval mode) folded into affine scale/shift.
    eps = 1e-5
    for li, width in zip((1, 2, 3), (h1, h2, h3)):
        gamma = 1.0 + 0.1 * jax.random.normal(keys[ki], (1, width), jnp.float32); ki += 1
        beta = 0.1 * jax.random.normal(keys[ki], (1, width), jnp.float32); ki += 1
        run_mean = 0.05 * jnp.arange(width, dtype=jnp.float32).reshape(1, width)
        run_var = 1.0 + 0.01 * jnp.arange(width, dtype=jnp.float32).reshape(1, width)
        scale = gamma / jnp.sqrt(run_var + eps)
        shift = beta - run_mean * scale
        params[f"s{li}"] = scale
        params[f"t{li}"] = shift
    return params


def mlp3_reference(x, p):
    """Pure-f32, un-folded reference (eval-mode semantics)."""
    h = _leaky_relu(x @ p["w1"] + p["b1"]) * p["s1"] + p["t1"]
    h = _leaky_relu(h @ p["w2"] + p["b2"]) * p["s2"] + p["t2"]
    h = _leaky_relu(h @ p["w3"] + p["b3"]) * p["s3"] + p["t3"]
    return h @ p["w4"] + p["b4"]


if __name__ == "__main__":
    inputs_size = 32
    output_size = 8
    batch = 16

    key = jax.random.PRNGKey(0)
    kx, kp = jax.random.split(key)
    x = jax.random.normal(kx, (batch, inputs_size), jnp.float32)
    params = init_params(kp, inputs_size, output_size)

    out = mlp3_forward(x, params)
    out = jax.block_until_ready(out)

    ref = mlp3_reference(x, params)
    assert out.shape == (batch, output_size)
    # bf16 matmul operands (f32 accumulation) -> loosened tolerance.
    assert jnp.allclose(out, ref, atol=5e-2, rtol=5e-2), "mismatch vs reference"

    print("KERNEL_OK")
</pallas_src>

<mosaic_0001>
module attributes {stable_mosaic.version = 11 : i64} {
  func.func @mlp3_kernel(%arg0: i32, %arg1: memref<16x32xbf16, #tpu.memory_space<vmem>>, %arg2: memref<32x128xbf16, #tpu.memory_space<vmem>>, %arg3: memref<1x128xf32, #tpu.memory_space<vmem>>, %arg4: memref<128x32xbf16, #tpu.memory_space<vmem>>, %arg5: memref<1x32xf32, #tpu.memory_space<vmem>>, %arg6: memref<32x8xbf16, #tpu.memory_space<vmem>>, %arg7: memref<1x8xf32, #tpu.memory_space<vmem>>, %arg8: memref<8x128xbf16, #tpu.memory_space<vmem>>, %arg9: memref<1x128xf32, #tpu.memory_space<vmem>>, %arg10: memref<16x128xf32, #tpu.memory_space<vmem>>) attributes {dimension_semantics = [#tpu.dimension_semantics<parallel>], iteration_bounds = array<i64: 1>, scalar_prefetch = 0 : i64, scratch_operands = 0 : i64, tpu.core_type = #tpu.core_type<tc>, window_params = [{transform_indices = @transform_0, window_bounds = array<i64: 16, 32>}, {pipeline_mode = #tpu.pipeline_mode<synchronous>, transform_indices = @transform_1, window_bounds = array<i64: 32, 128>}, {pipeline_mode = #tpu.pipeline_mode<synchronous>, transform_indices = @transform_2, window_bounds = array<i64: 1, 128>}, {pipeline_mode = #tpu.pipeline_mode<synchronous>, transform_indices = @transform_3, window_bounds = array<i64: 128, 32>}, {pipeline_mode = #tpu.pipeline_mode<synchronous>, transform_indices = @transform_4, window_bounds = array<i64: 1, 32>}, {pipeline_mode = #tpu.pipeline_mode<synchronous>, transform_indices = @transform_5, window_bounds = array<i64: 32, 8>}, {pipeline_mode = #tpu.pipeline_mode<synchronous>, transform_indices = @transform_6, window_bounds = array<i64: 1, 8>}, {pipeline_mode = #tpu.pipeline_mode<synchronous>, transform_indices = @transform_7, window_bounds = array<i64: 8, 128>}, {pipeline_mode = #tpu.pipeline_mode<synchronous>, transform_indices = @transform_8, window_bounds = array<i64: 1, 128>}, {transform_indices = @transform_9, window_bounds = array<i64: 16, 128>}]} {
    %c0 = arith.constant 0 : index
    %c0_0 = arith.constant 0 : index
    %0 = vector.load %arg1[%c0, %c0_0] : memref<16x32xbf16, #tpu.memory_space<vmem>>, vector<16x32xbf16>
    %c0_1 = arith.constant 0 : index
    %c0_2 = arith.constant 0 : index
    %1 = vector.load %arg2[%c0_1, %c0_2] : memref<32x128xbf16, #tpu.memory_space<vmem>>, vector<32x128xbf16>
    %cst = arith.constant dense<0.000000e+00> : vector<16x128xf32>
    %2 = tpu.matmul %0, %1, %cst {dimension_numbers = #tpu.dot_dimension_numbers<[1], [0], [0], [1], [0, 0, 1, 1], [], []>} : vector<16x32xbf16>, vector<32x128xbf16>, vector<16x128xf32> -> vector<16x128xf32>
    %c0_3 = arith.constant 0 : index
    %c0_4 = arith.constant 0 : index
    %3 = vector.load %arg3[%c0_3, %c0_4] : memref<1x128xf32, #tpu.memory_space<vmem>>, vector<1x128xf32>
    %4 = vector.broadcast %3 : vector<1x128xf32> to vector<16x128xf32>
    %5 = arith.addf %2, %4 : vector<16x128xf32>
    %cst_5 = arith.constant 0.000000e+00 : f32
    %6 = vector.broadcast %cst_5 : f32 to vector<16x128xf32>
    %7 = arith.cmpf oge, %5, %6 : vector<16x128xf32>
    %cst_6 = arith.constant 0.00999999977 : f32
    %8 = vector.broadcast %cst_6 : f32 to vector<16x128xf32>
    %9 = arith.mulf %8, %5 : vector<16x128xf32>
    %10 = arith.select %7, %5, %9 : vector<16x128xi1>, vector<16x128xf32>
    %11 = arith.truncf %10 : vector<16x128xf32> to vector<16x128xbf16>
    %c0_7 = arith.constant 0 : index
    %c0_8 = arith.constant 0 : index
    %12 = vector.load %arg4[%c0_7, %c0_8] : memref<128x32xbf16, #tpu.memory_space<vmem>>, vector<128x32xbf16>
    %cst_9 = arith.constant dense<0.000000e+00> : vector<16x32xf32>
    %13 = tpu.matmul %11, %12, %cst_9 {dimension_numbers = #tpu.dot_dimension_numbers<[1], [0], [0], [1], [0, 0, 1, 1], [], []>} : vector<16x128xbf16>, vector<128x32xbf16>, vector<16x32xf32> -> vector<16x32xf32>
    %c0_10 = arith.constant 0 : index
    %c0_11 = arith.constant 0 : index
    %14 = vector.load %arg5[%c0_10, %c0_11] : memref<1x32xf32, #tpu.memory_space<vmem>>, vector<1x32xf32>
    %15 = vector.broadcast %14 : vector<1x32xf32> to vector<16x32xf32>
    %16 = arith.addf %13, %15 : vector<16x32xf32>
    %cst_12 = arith.constant 0.000000e+00 : f32
    %17 = vector.broadcast %cst_12 : f32 to vector<16x32xf32>
    %18 = arith.cmpf oge, %16, %17 : vector<16x32xf32>
    %cst_13 = arith.constant 0.00999999977 : f32
    %19 = vector.broadcast %cst_13 : f32 to vector<16x32xf32>
    %20 = arith.mulf %19, %16 : vector<16x32xf32>
    %21 = arith.select %18, %16, %20 : vector<16x32xi1>, vector<16x32xf32>
    %22 = arith.truncf %21 : vector<16x32xf32> to vector<16x32xbf16>
    %c0_14 = arith.constant 0 : index
    %c0_15 = arith.constant 0 : index
    %23 = vector.load %arg6[%c0_14, %c0_15] : memref<32x8xbf16, #tpu.memory_space<vmem>>, vector<32x8xbf16>
    %cst_16 = arith.constant dense<0.000000e+00> : vector<16x8xf32>
    %24 = tpu.matmul %22, %23, %cst_16 {dimension_numbers = #tpu.dot_dimension_numbers<[1], [0], [0], [1], [0, 0, 1, 1], [], []>} : vector<16x32xbf16>, vector<32x8xbf16>, vector<16x8xf32> -> vector<16x8xf32>
    %c0_17 = arith.constant 0 : index
    %c0_18 = arith.constant 0 : index
    %25 = vector.load %arg7[%c0_17, %c0_18] : memref<1x8xf32, #tpu.memory_space<vmem>>, vector<1x8xf32>
    %26 = vector.broadcast %25 : vector<1x8xf32> to vector<16x8xf32>
    %27 = arith.addf %24, %26 : vector<16x8xf32>
    %cst_19 = arith.constant 0.000000e+00 : f32
    %28 = vector.broadcast %cst_19 : f32 to vector<16x8xf32>
    %29 = arith.cmpf oge, %27, %28 : vector<16x8xf32>
    %cst_20 = arith.constant 0.00999999977 : f32
    %30 = vector.broadcast %cst_20 : f32 to vector<16x8xf32>
    %31 = arith.mulf %30, %27 : vector<16x8xf32>
    %32 = arith.select %29, %27, %31 : vector<16x8xi1>, vector<16x8xf32>
    %33 = arith.truncf %32 : vector<16x8xf32> to vector<16x8xbf16>
    %c0_21 = arith.constant 0 : index
    %c0_22 = arith.constant 0 : index
    %34 = vector.load %arg8[%c0_21, %c0_22] : memref<8x128xbf16, #tpu.memory_space<vmem>>, vector<8x128xbf16>
    %cst_23 = arith.constant dense<0.000000e+00> : vector<16x128xf32>
    %35 = tpu.matmul %33, %34, %cst_23 {dimension_numbers = #tpu.dot_dimension_numbers<[1], [0], [0], [1], [0, 0, 1, 1], [], []>} : vector<16x8xbf16>, vector<8x128xbf16>, vector<16x128xf32> -> vector<16x128xf32>
    %c0_24 = arith.constant 0 : index
    %c0_25 = arith.constant 0 : index
    %36 = vector.load %arg9[%c0_24, %c0_25] : memref<1x128xf32, #tpu.memory_space<vmem>>, vector<1x128xf32>
    %37 = vector.broadcast %36 : vector<1x128xf32> to vector<16x128xf32>
    %38 = arith.addf %35, %37 : vector<16x128xf32>
    %c0_26 = arith.constant 0 : index
    %c0_27 = arith.constant 0 : index
    %39 = vector.load %arg10[%c0_26, %c0_27] : memref<16x128xf32, #tpu.memory_space<vmem>>, vector<16x128xf32>
    tpu.vector_store %arg10[%c0_26, %c0_27], %38 {strides = array<i32>} : memref<16x128xf32, #tpu.memory_space<vmem>>, vector<16x128xf32>,
    return
  }
  func.func @transform_0(%arg0: i32) -> (i32, i32) {
    %c0_i32 = arith.constant 0 : i32
    %c0_i32_0 = arith.constant 0 : i32
    return %arg0, %c0_i32 : i32, i32
  }
  func.func @transform_1(%arg0: i32) -> (i32, i32) {
    %c0_i32 = arith.constant 0 : i32
    %c0_i32_0 = arith.constant 0 : i32
    %c0_i32_1 = arith.constant 0 : i32
    return %c0_i32, %c0_i32_0 : i32, i32
  }
  func.func @transform_2(%arg0: i32) -> (i32, i32) {
    %c0_i32 = arith.constant 0 : i32
    %c0_i32_0 = arith.constant 0 : i32
    %c0_i32_1 = arith.constant 0 : i32
    return %c0_i32, %c0_i32_0 : i32, i32
  }
  func.func @transform_3(%arg0: i32) -> (i32, i32) {
    %c0_i32 = arith.constant 0 : i32
    %c0_i32_0 = arith.constant 0 : i32
    %c0_i32_1 = arith.constant 0 : i32
    return %c0_i32, %c0_i32_0 : i32, i32
  }
  func.func @transform_4(%arg0: i32) -> (i32, i32) {
    %c0_i32 = arith.constant 0 : i32
    %c0_i32_0 = arith.constant 0 : i32
    %c0_i32_1 = arith.constant 0 : i32
    return %c0_i32, %c0_i32_0 : i32, i32
  }
  func.func @transform_5(%arg0: i32) -> (i32, i32) {
    %c0_i32 = arith.constant 0 : i32
    %c0_i32_0 = arith.constant 0 : i32
    %c0_i32_1 = arith.constant 0 : i32
    return %c0_i32, %c0_i32_0 : i32, i32
  }
  func.func @transform_6(%arg0: i32) -> (i32, i32) {
    %c0_i32 = arith.constant 0 : i32
    %c0_i32_0 = arith.constant 0 : i32
    %c0_i32_1 = arith.constant 0 : i32
    return %c0_i32, %c0_i32_0 : i32, i32
  }
  func.func @transform_7(%arg0: i32) -> (i32, i32) {
    %c0_i32 = arith.constant 0 : i32
    %c0_i32_0 = arith.constant 0 : i32
    %c0_i32_1 = arith.constant 0 : i32
    return %c0_i32, %c0_i32_0 : i32, i32
  }
  func.func @transform_8(%arg0: i32) -> (i32, i32) {
    %c0_i32 = arith.constant 0 : i32
    %c0_i32_0 = arith.constant 0 : i32
    %c0_i32_1 = arith.constant 0 : i32
    return %c0_i32, %c0_i32_0 : i32, i32
  }
  func.func @transform_9(%arg0: i32) -> (i32, i32) {
    %c0_i32 = arith.constant 0 : i32
    %c0_i32_0 = arith.constant 0 : i32
    return %arg0, %c0_i32 : i32, i32
  }
}

</mosaic_0001>

<llo_original>
// kernel: tpu_custom_call.1
$region0: #{tpu_custom_call.1}
  #allocation0 [shape = 'u32[]', space=smem, size = 0x4, offset = 0x4, fixed_abs, tag = 'smem constant byte address 0x4 - core index']
  #allocation1 [shape = 'u32[72,128]{1,0:T(1,128)}', space=vmem, size = 0x9000, scoped, tag = 'internal scratch']
  %s0 = inlined_call_operand.vmem [shape: bf16[16,32], index: 0, kind: input, shape index: {}]
  %s1 = inlined_call_operand.vmem [shape: bf16[32,128], index: 1, kind: input, shape index: {}]
  %s2 = inlined_call_operand.vmem [shape: f32[1,128], index: 2, kind: input, shape index: {}]
  %s3 = inlined_call_operand.vmem [shape: bf16[128,32], index: 3, kind: input, shape index: {}]
  %s4 = inlined_call_operand.vmem [shape: f32[1,32], index: 4, kind: input, shape index: {}]
  %s5 = inlined_call_operand.vmem [shape: bf16[32,8], index: 5, kind: input, shape index: {}]
  %s6 = inlined_call_operand.vmem [shape: f32[1,8], index: 6, kind: input, shape index: {}]
  %s7 = inlined_call_operand.vmem [shape: bf16[8,128], index: 7, kind: input, shape index: {}]
  %s8 = inlined_call_operand.vmem [shape: f32[1,128], index: 8, kind: input, shape index: {}]
  %s9 = inlined_call_operand.hbm [shape: f32[16,128], index: 9, kind: output, shape index: {}]
  %s10 = sld [smem:[#allocation0]]
  $region46: #{tpu_custom_call.1} parent=0
    _
  %s12 = ssub.s32 1, %s10
  %s13 = scalar_select 0, %s12, %s10
  $region1: #{tpu_custom_call.1} parent=0
    #allocation2 [shape = 'u8[8192]{0}', space=vmem, size = 0x2000, scoped, tag = 'output window, operand 0, single buffered']
    #allocation3 [shape = 's32[1]{0}', space=sflag, size = 0x4, scoped, tag = 'scoped memory for tpu_custom_call.1']
    %14 = vsyncpa [#allocation3], 0
    // Predicated region
    $region2: #{tpu_custom_call.1} parent=1 // pred_check
      _
    $region3: #{tpu_custom_call.1} parent=1 // pred_check_branch
      %16 = sbr.rel (0) target = $region5
    $region4: #{tpu_custom_call.1} parent=1 // pred_region
      _
    $region5: #{tpu_custom_call.1} parent=1 // pred_fallthru
      _
    // Predicated region
    $region6: #{tpu_custom_call.1} parent=1 // pred_check
      _
    $region7: #{tpu_custom_call.1} parent=1 // pred_check_branch
      %18 = sbr.rel (0) target = $region9
    $region8: #{tpu_custom_call.1} parent=1 // pred_region
      _
    $region9: #{tpu_custom_call.1} parent=1 // pred_fallthru
      _
    // Predicated region
    $region10: #{tpu_custom_call.1} parent=1 // pred_check
      _
    $region11: #{tpu_custom_call.1} parent=1 // pred_check_branch
      %20 = sbr.rel (0) target = $region13
    $region12: #{tpu_custom_call.1} parent=1 // pred_region
      _
    $region13: #{tpu_custom_call.1} parent=1 // pred_fallthru
      _
    // Predicated region
    $region14: #{tpu_custom_call.1} parent=1 // pred_check
      _
    $region15: #{tpu_custom_call.1} parent=1 // pred_check_branch
      %22 = sbr.rel (0) target = $region17
    $region16: #{tpu_custom_call.1} parent=1 // pred_region
      _
    $region17: #{tpu_custom_call.1} parent=1 // pred_fallthru
      _
    // Predicated region
    $region18: #{tpu_custom_call.1} parent=1 // pred_check
      _
    $region19: #{tpu_custom_call.1} parent=1 // pred_check_branch
      %24 = sbr.rel (0) target = $region21
    $region20: #{tpu_custom_call.1} parent=1 // pred_region
      _
    $region21: #{tpu_custom_call.1} parent=1 // pred_fallthru
      _
    // Predicated region
    $region22: #{tpu_custom_call.1} parent=1 // pred_check
      _
    $region23: #{tpu_custom_call.1} parent=1 // pred_check_branch
      %26 = sbr.rel (0) target = $region25
    $region24: #{tpu_custom_call.1} parent=1 // pred_region
      _
    $region25: #{tpu_custom_call.1} parent=1 // pred_fallthru
      _
    // Predicated region
    $region26: #{tpu_custom_call.1} parent=1 // pred_check
      _
    $region27: #{tpu_custom_call.1} parent=1 // pred_check_branch
      %28 = sbr.rel (0) target = $region29
    $region28: #{tpu_custom_call.1} parent=1 // pred_region
      _
    $region29: #{tpu_custom_call.1} parent=1 // pred_fallthru
      _
    // Predicated region
    $region30: #{tpu_custom_call.1} parent=1 // pred_check
      _
    $region31: #{tpu_custom_call.1} parent=1 // pred_check_branch
      %30 = sbr.rel (0) target = $region33
    $region32: #{tpu_custom_call.1} parent=1 // pred_region
      _
    $region33: #{tpu_custom_call.1} parent=1 // pred_fallthru
      _
    // Predicated region
    $region34: #{tpu_custom_call.1} parent=1 // pred_check
      _
    $region35: #{tpu_custom_call.1} parent=1 // pred_check_branch
      %32 = sbr.rel (0) target = $region37
    $region36: #{tpu_custom_call.1} parent=1 // pred_region
      _
    $region37: #{tpu_custom_call.1} parent=1 // pred_fallthru
      _
    %v34 = vld [vmem:[%s0] sm:$0xf]
    %v35 = vld [vmem:[%s0 + $0x4] sm:$0xf]
    %v36 = vld [vmem:[%s1] sm:$0xf]
    %v37 = vld [vmem:[%s1 + $0x4] sm:$0xf]
    %v38 = vld [vmem:[%s1 + $0x8] sm:$0xf]
    %v39 = vld [vmem:[%s1 + $0xc] sm:$0xf]
    %v40 = vld [vmem:[%s2] sm:$0x1]
    %v42 = vperm.slane %v40, 0
    %v46 = vunpack.c.l.b16 %v34
    %v47 = vunpack.c.l.b16 %v35
    %v48 = vpack.c.b16 %v47, %v46
    %v53 = vunpack.c.l.b16 %v36
    %v54 = vunpack.c.l.b16 %v37
    %v55 = vunpack.c.l.b16 %v38
    %v56 = vunpack.c.l.b16 %v39
    %v57 = vpack.c.b16 %v54, %v53
    %v58 = vpack.c.b16 %v56, %v55
    %vm61 = vcmask 261120
    %v63 = vsel %vm61, %v48, 0
    %65 = vmatpush.bf16.msra.mxu0 0
    %66 = vmatpush.bf16.msra.mxu0 0
    %67 = vmatpush.bf16.msra.mxu0 0
    %68 = vmatpush.bf16.msra.mxu0 0
    %69 = vmatpush.bf16.msra.mxu0 0
    %70 = vmatpush.bf16.msra.mxu0 0
    %71 = vmatpush.bf16.msra.mxu0 %v58
    %72 = vmatpush.bf16.msra.mxu0 %v57
    %73 = vmatmul.bf16.gmra.mxu0 %v63
    %v74 = vpop.f32.mrf.mxu0
    %v75 = vadd.f32 %v42, %v74
    %v76 = vpop.f32.mrf.mxu0
    %v77 = vadd.f32 %v42, %v76
    %78 = vdwg.mxu0
    %vm79 = vcmp.ge.f32.partialorder %v75, 0.0
    %vm80 = vcmp.ge.f32.partialorder %v77, 0.0
    %v81 = vmul.f32 %v75, 0.01
    %v82 = vmul.f32 %v77, 0.01
    %v83 = vsel %vm79, %v75, %v81
    %v84 = vsel %vm80, %v77, %v82
    %v85 = vpack.c.bf16 %v84, %v83
    %v86 = vld [vmem:[%s3] sm:$0xf]
    %v87 = vld [vmem:[%s3 + $0x4] sm:$0xf]
    %v88 = vld [vmem:[%s3 + $0x8] sm:$0xf]
    %v89 = vld [vmem:[%s3 + $0xc] sm:$0xf]
    %v90 = vld [vmem:[%s3 + $0x10] sm:$0xf]
    %v91 = vld [vmem:[%s3 + $0x14] sm:$0xf]
    %v92 = vld [vmem:[%s3 + $0x18] sm:$0xf]
    %v93 = vld [vmem:[%s3 + $0x1c] sm:$0xf]
    %v94 = vld [vmem:[%s3 + $0x20] sm:$0xf]
    %v95 = vld [vmem:[%s3 + $0x24] sm:$0xf]
    %v96 = vld [vmem:[%s3 + $0x28] sm:$0xf]
    %v97 = vld [vmem:[%s3 + $0x2c] sm:$0xf]
    %v98 = vld [vmem:[%s3 + $0x30] sm:$0xf]
    %v99 = vld [vmem:[%s3 + $0x34] sm:$0xf]
    %v100 = vld [vmem:[%s3 + $0x38] sm:$0xf]
    %v101 = vld [vmem:[%s3 + $0x3c] sm:$0xf]
    %v102 = vld [vmem:[%s4] sm:$0x1]
    %v104 = vperm.slane %v102, 0
    %v122 = vunpack.c.l.b16 %v86
    %v123 = vunpack.c.l.b16 %v87
    %v124 = vunpack.c.l.b16 %v88
    %v125 = vunpack.c.l.b16 %v89
    %v126 = vunpack.c.l.b16 %v90
    %v127 = vunpack.c.l.b16 %v91
    %v128 = vunpack.c.l.b16 %v92
    %v129 = vunpack.c.l.b16 %v93
    %v130 = vunpack.c.l.b16 %v94
    %v131 = vunpack.c.l.b16 %v95
    %v132 = vunpack.c.l.b16 %v96
    %v133 = vunpack.c.l.b16 %v97
    %v134 = vunpack.c.l.b16 %v98
    %v135 = vunpack.c.l.b16 %v99
    %v136 = vunpack.c.l.b16 %v100
    %v137 = vunpack.c.l.b16 %v101
    %v138 = vpack.c.b16 %v123, %v122
    %v139 = vpack.c.b16 %v125, %v124
    %v140 = vpack.c.b16 %v127, %v126
    %v141 = vpack.c.b16 %v129, %v128
    %v142 = vpack.c.b16 %v131, %v130
    %v143 = vpack.c.b16 %v133, %v132
    %v144 = vpack.c.b16 %v135, %v134
    %v145 = vpack.c.b16 %v137, %v136
    %154 = vmatpush.bf16.msra.mxu0 %v145
    %155 = vmatpush.bf16.msra.mxu0 %v144
    %156 = vmatpush.bf16.msra.mxu0 %v143
    %157 = vmatpush.bf16.msra.mxu0 %v142
    %158 = vmatpush.bf16.msra.mxu0 %v141
    %159 = vmatpush.bf16.msra.mxu0 %v140
    %160 = vmatpush.bf16.msra.mxu0 %v139
    %161 = vmatpush.bf16.msra.mxu0 %v138
    %162 = vmatmul.bf16.gmra.mxu0 %v85
    %v163 = vpop.f32.mrf.mxu0
    %v164 = vadd.f32 %v104, %v163
    %v165 = vpop.f32.mrf.mxu0
    %v166 = vadd.f32 %v104, %v165
    %167 = vdwg.mxu0
    %vm168 = vcmp.ge.f32.partialorder %v164, 0.0
    %vm169 = vcmp.ge.f32.partialorder %v166, 0.0
    %v170 = vmul.f32 %v164, 0.01
    %v171 = vmul.f32 %v166, 0.01
    %v172 = vsel %vm168, %v164, %v170
    %v173 = vsel %vm169, %v166, %v171
    %v174 = vpack.c.bf16 %v173, %v172
    %v175 = vld [vmem:[%s5] sm:$0xf]
    %v176 = vld [vmem:[%s5 + $0x4] sm:$0xf]
    %v177 = vld [vmem:[%s5 + $0x8] sm:$0xf]
    %v178 = vld [vmem:[%s5 + $0xc] sm:$0xf]
    %v179 = vld [vmem:[%s6] sm:$0x1]
    %v181 = vperm.slane %v179, 0
    %v187 = vunpack.c.l.b16 %v175
    %v188 = vunpack.c.l.b16 %v176
    %v189 = vunpack.c.l.b16 %v177
    %v190 = vunpack.c.l.b16 %v178
    %v191 = vpack.c.b16 %v188, %v187
    %v192 = vpack.c.b16 %v190, %v189
    %v196 = vsel %vm61, %v174, 0
    %198 = vmatpush.bf16.msra.mxu0 0
    %199 = vmatpush.bf16.msra.mxu0 0
    %200 = vmatpush.bf16.msra.mxu0 0
    %201 = vmatpush.bf16.msra.mxu0 0
    %202 = vmatpush.bf16.msra.mxu0 0
    %203 = vmatpush.bf16.msra.mxu0 0
    %204 = vmatpush.bf16.msra.mxu0 %v192
    %205 = vmatpush.bf16.msra.mxu0 %v191
    %206 = vmatmul.bf16.gmra.mxu0 %v196
    %v207 = vpop.f32.mrf.mxu0
    %v208 = vadd.f32 %v181, %v207
    %v209 = vpop.f32.mrf.mxu0
    %v210 = vadd.f32 %v181, %v209
    %211 = vdwg.mxu0
    %vm212 = vcmp.ge.f32.partialorder %v208, 0.0
    %vm213 = vcmp.ge.f32.partialorder %v210, 0.0
    %v214 = vmul.f32 %v208, 0.01
    %v215 = vmul.f32 %v210, 0.01
    %v216 = vsel %vm212, %v208, %v214
    %v217 = vsel %vm213, %v210, %v215
    %v218 = vpack.c.bf16 %v217, %v216
    %v219 = vld [vmem:[%s7] sm:$0xf]
    %v220 = vld [vmem:[%s8] sm:$0x1]
    %v222 = vperm.slane %v220, 0
    %vm224 = vcmask 64512
    %v226 = vsel %vm224, %v218, 0
    %vm228 = vcmask 1043456
    %v230 = vsel %vm228, %v219, 0
    %232 = vmatpush.bf16.msra.mxu0 0
    %233 = vmatpush.bf16.msra.mxu0 0
    %234 = vmatpush.bf16.msra.mxu0 0
    %235 = vmatpush.bf16.msra.mxu0 0
    %236 = vmatpush.bf16.msra.mxu0 0
    %237 = vmatpush.bf16.msra.mxu0 0
    %238 = vmatpush.bf16.msra.mxu0 0
    %239 = vmatpush.bf16.msra.mxu0 %v230
    %240 = vmatmul.bf16.gmra.mxu0 %v226
    %v241 = vpop.f32.mrf.mxu0
    %v242 = vadd.f32 %v222, %v241
    %v243 = vpop.f32.mrf.mxu0
    %v244 = vadd.f32 %v222, %v243
    %245 = vdwg.mxu0
    %246 = vst [vmem:[#allocation2] sm:$0xff] %v242
    %247 = vst [vmem:[#allocation2 + $0x8] sm:$0xff] %v244
    // Predicated region
    $region38: #{tpu_custom_call.1} parent=1 // pred_check
      _
    $region39: #{tpu_custom_call.1} parent=1 // pred_check_branch
      %249 = sbr.rel (0) target = $region41
    $region40: #{tpu_custom_call.1} parent=1 // pred_region
      %251 = vsyncadd [#allocation3], 0
      %s252 = sshll.u32 [#allocation2], 4
      %s253 = int_to_ptr.vmem [resolvable:$true] %s252
      %s254 = sshll.u32 %s9, 4
      %s255 = int_to_ptr.hbm [resolvable:$true] %s254
      %260 = dma.vmem_to_hbm [thread:$0]  %s253, 256, %s255, [#allocation3], 128, 128, 8
    $region41: #{tpu_custom_call.1} parent=1 // pred_fallthru
      _
    // Predicated region
    $region42: #{tpu_custom_call.1} parent=1 // pred_check
      _
    $region43: #{tpu_custom_call.1} parent=1 // pred_check_branch
      %262 = sbr.rel (0) target = $region45
    $region44: #{tpu_custom_call.1} parent=1 // pred_region
      %264 = dma.done [#allocation3], 256
    $region45: #{tpu_custom_call.1} parent=1 // pred_fallthru
      _
    %265 = vsyncpa [#allocation3], 1

</llo_original>
